<compile_context>
chip_gen: v5e
topology: v5e:2x2
jax: 0.10.0
libtpu: 0.0.40
codegen_flags: <defaults>
</compile_context>

<pallas_src>
import jax
import jax.numpy as jnp
from jax import lax
from jax.experimental import pallas as pl
from jax.experimental.pallas import tpu as pltpu

# ----------------- small, self-consistent configuration -----------------
B = 2                  # batch
IMG = 16               # img_size
IN_C = 3               # RGB input
SHALLOW_C = 8          # channels of shallow backbone feature (all_feas[0])
PROTO_C = 32           # prototype_shape[1]
FEAT_C = 2 * PROTO_C   # backbone output channels -> exactly one bottleneck block
NUM_CLASSES = 4
PPC = 2                # num_prototypes_per_class
P = NUM_CLASSES * PPC  # num_prototypes = prototype_shape[0]
NUM_ATTR = 112         # num_attributes (module default)
FEA = IMG // 4         # deep feature spatial size (4)
HW = FEA * FEA         # 16
SHALLOW = IMG // 2     # shallow spatial size (8), divisible by FEA
HEAD_W = NUM_ATTR + NUM_CLASSES   # fused attr+class-identity head width (116)

# --------------------------- output slab layout ---------------------------
#   [  0:128)  projection map, P-major: per batch row it is (P, HW) flattened,
#              so the wrapper's (B, P, HW) view is a free reshape
#   [128:240)  attributes logits (112 wide, starts exactly at a vreg boundary)
#   [240:248)  cosine min distances      [248:256)  prototype activations
#   [256:260)  class logits              [260:264)  logits from attributes
#   [264:384)  zero padding (keeps the output store lane-dense / unmasked)
PROJ_OFF = 0
ATTR_OFF = P * HW                     # 128
COS_OFF = ATTR_OFF + NUM_ATTR         # 240
PMAX_OFF = COS_OFF + P                # 248
LOG_OFF = PMAX_OFF + P                # 256
LATT_OFF = LOG_OFF + NUM_CLASSES      # 260
SLAB = 384                            # 3 full vreg lane-columns


# ------------------------------ Pallas kernel ------------------------------
def newnet_head_kernel(xf_ref, w1_ref, b1_ref, w2_ref, b2_ref, pnt_ref,
                       hw_ref, hb_ref, cw_ref, cb_ref, slab_ref):
    bz = xf_ref.shape[0]
    bf16 = jnp.bfloat16

    # input relayout folded into the kernel: (B, C, HW) -> (B*HW, C)  (XLU slot)
    f = jnp.transpose(xf_ref[...], (0, 2, 1)).reshape(bz * HW, FEAT_C)

    # add_on_layers (bottleneck): Conv1x1 -> ReLU -> Conv1x1 -> Sigmoid
    # MXU operands in bf16 (f32 accumulation); elementwise/EUP chain stays f32.
    h = jnp.dot(f.astype(bf16), w1_ref[...],
                preferred_element_type=jnp.float32) + b1_ref[...]
    h = jnp.maximum(h, 0.0)
    s = jnp.dot(h.astype(bf16), w2_ref[...],
                preferred_element_type=jnp.float32) + b2_ref[...]
    z = jax.nn.sigmoid(s)                                   # (B*HW, PROTO_C) f32, EUP

    # _project2basis: conv with L2-normalized prototypes (pre-normalized+T in prep)
    proj = jnp.dot(z.astype(bf16), pnt_ref[...],
                   preferred_element_type=jnp.float32)      # (B*HW, P) f32

    # _cosine_convolution, algebraically fused:
    #   cos = -(z/||z||) . p_n = -(z . p_n) * rsqrt(||z||^2)
    # (eps 1e-24 on ||z||^2 == F.normalize's 1e-12 on ||z||; z>0 so it never binds)
    inv_nrm = lax.rsqrt(jnp.maximum(jnp.sum(z * z, axis=-1, keepdims=True), 1e-24))
    sim = proj * inv_nrm                                    # (B*HW, P)

    # per-batch global pooling over HW
    proj_b = proj.reshape(bz, HW, P)
    proj_max = jnp.max(proj_b, axis=1)                      # (B, P)
    cos_min = -jnp.max(sim.reshape(bz, HW, P), axis=1)      # (B, P)

    # fused [attributes_predictor.weight.T | prototype_class_identity] head:
    #   head[:, :NUM_ATTR] = attribute logits ; head[:, NUM_ATTR:] = class logits
    head = jnp.dot(proj_max.astype(bf16), hw_ref[...],
                   preferred_element_type=jnp.float32) + hb_ref[...]   # (B, 116)
    attr = head[:, :NUM_ATTR]
    logits = head[:, NUM_ATTR:]

    # class_predictor (Linear NUM_ATTR -> NUM_CLASSES)
    lattri = jnp.dot(attr.astype(bf16), cw_ref[...],
                     preferred_element_type=jnp.float32) + cb_ref[...]  # (B, 4)

    # assemble the lane-dense slab with aligned slice stores
    slab_ref[:, PROJ_OFF:ATTR_OFF] = \
        jnp.transpose(proj_b, (0, 2, 1)).reshape(bz, P * HW)   # (B, P*HW), P-major
    slab_ref[:, ATTR_OFF:COS_OFF] = attr
    slab_ref[:, COS_OFF:PMAX_OFF] = cos_min
    slab_ref[:, PMAX_OFF:LOG_OFF] = proj_max
    slab_ref[:, LOG_OFF:SLAB] = jnp.zeros((bz, SLAB - LOG_OFF), jnp.float32)
    slab_ref[:, LOG_OFF:LOG_OFF + NUM_CLASSES] = logits
    slab_ref[:, LATT_OFF:LATT_OFF + NUM_CLASSES] = lattri


def run_head(xf3, head):
    """xf3: (B, FEAT_C, HW) f32 deep feature (free reshape of contiguous NCHW)."""
    bz = xf3.shape[0]
    # Single invocation, no grid: the total footprint is tens of KB, so every
    # operand is staged whole into VMEM (explicit, version-robust placement).
    vmem_in = [pl.BlockSpec(memory_space=pltpu.MemorySpace.VMEM) for _ in range(10)]
    return pl.pallas_call(
        newnet_head_kernel,
        out_shape=jax.ShapeDtypeStruct((bz, SLAB), jnp.float32),
        in_specs=vmem_in,
        out_specs=pl.BlockSpec(memory_space=pltpu.MemorySpace.VMEM),
        cost_estimate=pl.CostEstimate(flops=220_000,
                                      transcendentals=1_100,
                                      bytes_accessed=24_000),
    )(xf3, head["w1"], head["b1"], head["w2"], head["b2"], head["pnt"],
      head["hw"], head["hb"], head["cw_t"], head["cb"])


# ---------------------- backbone ("features" module) ----------------------
# TODO(synk): the real `features` backbone (ResNet/DenseNet/MyVision) is an
# external injected module; a minimal RES-like 2-conv backbone in plain JAX
# stands in (shallow_layer_idx = 0, forward_all returns all intermediates).
def conv2d_nchw(x, w, b, stride):
    y = lax.conv_general_dilated(
        x, w, window_strides=(stride, stride), padding="SAME",
        dimension_numbers=("NCHW", "OIHW", "NCHW"))
    return y + b[None, :, None, None]


def features_forward_all(x, params):
    f0 = jnp.maximum(conv2d_nchw(x, params["bw1"], params["bb1"], 2), 0.0)   # (B,8,8,8)
    f1 = jnp.maximum(conv2d_nchw(f0, params["bw2"], params["bb2"], 2), 0.0)  # (B,64,4,4)
    return f1, [f0, f1]


# --------------------------- parameter preparation --------------------------
def prep_head_params(params):
    """One-time constant glue, hoisted OUT of the per-call forward path:
    prototype L2-normalization, class-identity construction, head-weight
    fusion, transposes, and bf16 casts of every MXU operand."""
    f32, bf16 = jnp.float32, jnp.bfloat16
    # prototype L2 normalization (F.normalize over channel dim)
    pv = params["prototype_vectors"][:, :, 0, 0]                        # (P, PROTO_C)
    pn = pv / jnp.maximum(jnp.linalg.norm(pv, axis=1, keepdims=True), 1e-12)
    # prototype_class_identity: row j has a 1 at class j // PPC
    ident = jnp.zeros((P, NUM_CLASSES), f32)
    ident = ident.at[jnp.arange(P), jnp.arange(P) // PPC].set(1.0)
    # fused head weight: [attributes_predictor.weight.T | class-identity]
    head_w = jnp.concatenate([params["aw"].T, ident], axis=1)           # (P, 116)
    head_b = jnp.concatenate([params["ab"],
                              jnp.zeros((NUM_CLASSES,), f32)])[None, :]
    return {
        "w1": params["w1"].astype(bf16), "b1": params["b1"],
        "w2": params["w2"].astype(bf16), "b2": params["b2"],
        "pnt": pn.T.astype(bf16),                                       # (PROTO_C, P)
        "hw": head_w.astype(bf16), "hb": head_b,
        "cw_t": params["cw"].T.astype(bf16), "cb": params["cb"][None, :],
    }


# ------------------------------ full forward ------------------------------
def newnet_forward(x, params, head):
    xf, all_feas = features_forward_all(x, params)
    bz = xf.shape[0]

    # (B, FEAT_C, HW): free reshape of contiguous NCHW; relayout happens in-kernel
    xf3 = xf.reshape(bz, FEAT_C, HW)

    slab = run_head(xf3, head)

    # unpack the lane-dense slab
    project_distances = slab[:, PROJ_OFF:ATTR_OFF].reshape(bz, P, HW)   # free reshape
    attributes_logits = slab[:, ATTR_OFF:COS_OFF]                       # (B, A)
    cosine_min_distances = slab[:, COS_OFF:PMAX_OFF]                    # (B, P)
    logits = slab[:, LOG_OFF:LOG_OFF + NUM_CLASSES]                     # (B, C)
    logits_attri = slab[:, LATT_OFF:LATT_OFF + NUM_CLASSES]             # (B, C)

    # shallow feature re-tiling (pure reshape/permute glue, as in forward())
    shallow = all_feas[0]                                               # shallow_layer_idx = 0
    sbz, dim, ss = shallow.shape[0], shallow.shape[1], shallow.shape[-1]
    sf = shallow.reshape(sbz, dim, FEA, ss // FEA, FEA, ss // FEA)
    sf = jnp.transpose(sf, (0, 1, 3, 5, 2, 4))
    sf = sf.reshape(sbz, -1, FEA, FEA).reshape(sbz, -1, HW)
    deep = all_feas[-1].reshape(sbz, all_feas[-1].shape[1], -1)

    return ((logits, logits_attri, attributes_logits),
            (cosine_min_distances, project_distances, sf, deep, all_feas))


# ------------- pure-JAX f32 reference of the head (correctness) -------------
def head_reference(x, params):
    xf, _ = features_forward_all(x, params)
    bz = xf.shape[0]
    f = jnp.transpose(xf.reshape(bz, FEAT_C, HW), (0, 2, 1)).reshape(bz * HW, FEAT_C)
    pv = params["prototype_vectors"][:, :, 0, 0]
    pn = pv / jnp.maximum(jnp.linalg.norm(pv, axis=1, keepdims=True), 1e-12)
    h = jnp.maximum(f @ params["w1"] + params["b1"], 0.0)
    z = jax.nn.sigmoid(h @ params["w2"] + params["b2"])
    proj = z @ pn.T
    zn = z / jnp.maximum(jnp.linalg.norm(z, axis=-1, keepdims=True), 1e-12)
    cos = -(zn @ pn.T)
    proj_b = proj.reshape(bz, HW, P)
    proj_max = jnp.max(proj_b, axis=1)
    cos_min = jnp.min(cos.reshape(bz, HW, P), axis=1)
    logits = proj_max.reshape(bz, NUM_CLASSES, PPC).sum(-1)
    attr = proj_max @ params["aw"].T + params["ab"]
    lattri = attr @ params["cw"].T + params["cb"]
    project_distances = jnp.transpose(proj_b, (0, 2, 1))
    return logits, lattri, attr, cos_min, project_distances


def make_params(key):
    ks = jax.random.split(key, 10)
    f32 = jnp.float32
    return {
        # backbone
        "bw1": 0.1 * jax.random.normal(ks[0], (SHALLOW_C, IN_C, 3, 3), f32),
        "bb1": jnp.zeros((SHALLOW_C,), f32),
        "bw2": 0.1 * jax.random.normal(ks[1], (FEAT_C, SHALLOW_C, 3, 3), f32),
        "bb2": jnp.zeros((FEAT_C,), f32),
        # add_on bottleneck (kaiming-style scaled normals, biases = 0)
        "w1": (jax.random.normal(ks[2], (FEAT_C, PROTO_C), f32)
               * jnp.sqrt(2.0 / PROTO_C)),
        "b1": jnp.zeros((1, PROTO_C), f32),
        "w2": (jax.random.normal(ks[3], (PROTO_C, PROTO_C), f32)
               * jnp.sqrt(2.0 / PROTO_C)),
        "b2": jnp.zeros((1, PROTO_C), f32),
        # prototype vectors ~ U[0,1), shape (P, PROTO_C, 1, 1)
        "prototype_vectors": jax.random.uniform(ks[4], (P, PROTO_C, 1, 1), f32),
        # attributes_predictor: Linear(P -> NUM_ATTR)
        "aw": 0.1 * jax.random.normal(ks[5], (NUM_ATTR, P), f32),
        "ab": 0.01 * jax.random.normal(ks[6], (NUM_ATTR,), f32),
        # class_predictor: Linear(NUM_ATTR -> NUM_CLASSES)
        "cw": 0.1 * jax.random.normal(ks[7], (NUM_CLASSES, NUM_ATTR), f32),
        "cb": 0.01 * jax.random.normal(ks[8], (NUM_CLASSES,), f32),
    }


if __name__ == "__main__":
    key = jax.random.PRNGKey(0)
    pkey, xkey = jax.random.split(key)
    params = make_params(pkey)
    x = jax.random.normal(xkey, (B, IN_C, IMG, IMG), jnp.float32)

    head = prep_head_params(params)        # hoisted one-time weight prep
    fwd = jax.jit(newnet_forward)

    (logits, logits_attri, attributes_logits), \
        (cos_min, project_distances, shallow_feas, deep_feas, all_feas) = \
        jax.block_until_ready(fwd(x, params, head))

    # sanity: shapes match the PyTorch forward semantics
    assert logits.shape == (B, NUM_CLASSES)
    assert logits_attri.shape == (B, NUM_CLASSES)
    assert attributes_logits.shape == (B, NUM_ATTR)
    assert cos_min.shape == (B, P)
    assert project_distances.shape == (B, P, HW)
    assert shallow_feas.shape == (B, SHALLOW_C * (SHALLOW // FEA) ** 2, HW)
    assert deep_feas.shape == (B, FEAT_C, HW)

    # numerical check of the fused Pallas head against a pure-JAX f32 reference
    # (kernel matmuls use bf16 operands with f32 accumulation -> looser tolerance)
    rlog, rlat, rattr, rcos, rproj = head_reference(x, params)
    tol = dict(atol=5e-2, rtol=5e-2)
    assert jnp.allclose(logits, rlog, **tol)
    assert jnp.allclose(logits_attri, rlat, **tol)
    assert jnp.allclose(attributes_logits, rattr, **tol)
    assert jnp.allclose(cos_min, rcos, **tol)
    assert jnp.allclose(project_distances, rproj, **tol)

    print("KERNEL_OK")
</pallas_src>

<mosaic_0001>
module attributes {stable_mosaic.version = 11 : i64} {
  func.func @newnet_head_kernel(%arg0: memref<2x64x16xf32, #tpu.memory_space<vmem>>, %arg1: memref<64x32xbf16, #tpu.memory_space<vmem>>, %arg2: memref<1x32xf32, #tpu.memory_space<vmem>>, %arg3: memref<32x32xbf16, #tpu.memory_space<vmem>>, %arg4: memref<1x32xf32, #tpu.memory_space<vmem>>, %arg5: memref<32x8xbf16, #tpu.memory_space<vmem>>, %arg6: memref<8x116xbf16, #tpu.memory_space<vmem>>, %arg7: memref<1x116xf32, #tpu.memory_space<vmem>>, %arg8: memref<112x4xbf16, #tpu.memory_space<vmem>>, %arg9: memref<1x4xf32, #tpu.memory_space<vmem>>, %arg10: memref<2x384xf32, #tpu.memory_space<vmem>>) attributes {dimension_semantics = [], scalar_prefetch = 0 : i64, scratch_operands = 0 : i64, tpu.core_type = #tpu.core_type<tc>} {
    %c0 = arith.constant 0 : index
    %c0_0 = arith.constant 0 : index
    %c0_1 = arith.constant 0 : index
    %0 = vector.load %arg0[%c0, %c0_0, %c0_1] : memref<2x64x16xf32, #tpu.memory_space<vmem>>, vector<2x64x16xf32>
    %1 = tpu.transpose %0, [0, 2, 1] : vector<2x64x16xf32> -> vector<2x16x64xf32>
    %2 = vector.shape_cast %1 : vector<2x16x64xf32> to vector<32x64xf32>
    %3 = arith.truncf %2 : vector<32x64xf32> to vector<32x64xbf16>
    %c0_2 = arith.constant 0 : index
    %c0_3 = arith.constant 0 : index
    %4 = vector.load %arg1[%c0_2, %c0_3] : memref<64x32xbf16, #tpu.memory_space<vmem>>, vector<64x32xbf16>
    %cst = arith.constant dense<0.000000e+00> : vector<32x32xf32>
    %5 = tpu.matmul %3, %4, %cst {dimension_numbers = #tpu.dot_dimension_numbers<[1], [0], [0], [1], [0, 0, 1, 1], [], []>} : vector<32x64xbf16>, vector<64x32xbf16>, vector<32x32xf32> -> vector<32x32xf32>
    %c0_4 = arith.constant 0 : index
    %c0_5 = arith.constant 0 : index
    %6 = vector.load %arg2[%c0_4, %c0_5] : memref<1x32xf32, #tpu.memory_space<vmem>>, vector<1x32xf32>
    %7 = vector.broadcast %6 : vector<1x32xf32> to vector<32x32xf32>
    %8 = arith.addf %5, %7 : vector<32x32xf32>
    %cst_6 = arith.constant 0.000000e+00 : f32
    %9 = vector.broadcast %cst_6 : f32 to vector<32x32xf32>
    %10 = arith.maximumf %8, %9 : vector<32x32xf32>
    %11 = arith.truncf %10 : vector<32x32xf32> to vector<32x32xbf16>
    %c0_7 = arith.constant 0 : index
    %c0_8 = arith.constant 0 : index
    %12 = vector.load %arg3[%c0_7, %c0_8] : memref<32x32xbf16, #tpu.memory_space<vmem>>, vector<32x32xbf16>
    %cst_9 = arith.constant dense<0.000000e+00> : vector<32x32xf32>
    %13 = tpu.matmul %11, %12, %cst_9 {dimension_numbers = #tpu.dot_dimension_numbers<[1], [0], [0], [1], [0, 0, 1, 1], [], []>} : vector<32x32xbf16>, vector<32x32xbf16>, vector<32x32xf32> -> vector<32x32xf32>
    %c0_10 = arith.constant 0 : index
    %c0_11 = arith.constant 0 : index
    %14 = vector.load %arg4[%c0_10, %c0_11] : memref<1x32xf32, #tpu.memory_space<vmem>>, vector<1x32xf32>
    %15 = vector.broadcast %14 : vector<1x32xf32> to vector<32x32xf32>
    %16 = arith.addf %13, %15 : vector<32x32xf32>
    %17 = arith.negf %16 : vector<32x32xf32>
    %18 = math.exp %17 : vector<32x32xf32>
    %cst_12 = arith.constant 1.000000e+00 : f32
    %19 = vector.broadcast %cst_12 : f32 to vector<32x32xf32>
    %20 = arith.addf %19, %18 : vector<32x32xf32>
    %21 = arith.divf %19, %20 : vector<32x32xf32>
    %22 = arith.truncf %21 : vector<32x32xf32> to vector<32x32xbf16>
    %c0_13 = arith.constant 0 : index
    %c0_14 = arith.constant 0 : index
    %23 = vector.load %arg5[%c0_13, %c0_14] : memref<32x8xbf16, #tpu.memory_space<vmem>>, vector<32x8xbf16>
    %cst_15 = arith.constant dense<0.000000e+00> : vector<32x8xf32>
    %24 = tpu.matmul %22, %23, %cst_15 {dimension_numbers = #tpu.dot_dimension_numbers<[1], [0], [0], [1], [0, 0, 1, 1], [], []>} : vector<32x32xbf16>, vector<32x8xbf16>, vector<32x8xf32> -> vector<32x8xf32>
    %25 = arith.mulf %21, %21 : vector<32x32xf32>
    %cst_16 = arith.constant dense<0.000000e+00> : vector<32xf32>
    %26 = vector.multi_reduction <add>, %25, %cst_16 [1] : vector<32x32xf32> to vector<32xf32>
    %27 = vector.shape_cast %26 : vector<32xf32> to vector<32x1xf32>
    %cst_17 = arith.constant 1.000000e-24 : f32
    %28 = vector.broadcast %cst_17 : f32 to vector<32x1xf32>
    %29 = arith.maximumf %27, %28 : vector<32x1xf32>
    %30 = math.rsqrt %29 : vector<32x1xf32>
    %31 = vector.broadcast %30 : vector<32x1xf32> to vector<32x8xf32>
    %32 = arith.mulf %24, %31 : vector<32x8xf32>
    %33 = vector.shape_cast %24 : vector<32x8xf32> to vector<2x16x8xf32>
    %cst_18 = arith.constant dense<0xFF800000> : vector<2x8xf32>
    %34 = vector.multi_reduction <maximumf>, %33, %cst_18 [1] : vector<2x16x8xf32> to vector<2x8xf32>
    %35 = vector.shape_cast %32 : vector<32x8xf32> to vector<2x16x8xf32>
    %cst_19 = arith.constant dense<0xFF800000> : vector<2x8xf32>
    %36 = vector.multi_reduction <maximumf>, %35, %cst_19 [1] : vector<2x16x8xf32> to vector<2x8xf32>
    %cst_20 = arith.constant 0.000000e+00 : f32
    %37 = vector.broadcast %cst_20 : f32 to vector<2x8xf32>
    %38 = arith.subf %37, %36 : vector<2x8xf32>
    %39 = arith.truncf %34 : vector<2x8xf32> to vector<2x8xbf16>
    %c0_21 = arith.constant 0 : index
    %c0_22 = arith.constant 0 : index
    %40 = vector.load %arg6[%c0_21, %c0_22] : memref<8x116xbf16, #tpu.memory_space<vmem>>, vector<8x116xbf16>
    %cst_23 = arith.constant dense<0.000000e+00> : vector<2x116xf32>
    %41 = tpu.matmul %39, %40, %cst_23 {dimension_numbers = #tpu.dot_dimension_numbers<[1], [0], [0], [1], [0, 0, 1, 1], [], []>} : vector<2x8xbf16>, vector<8x116xbf16>, vector<2x116xf32> -> vector<2x116xf32>
    %c0_24 = arith.constant 0 : index
    %c0_25 = arith.constant 0 : index
    %42 = vector.load %arg7[%c0_24, %c0_25] : memref<1x116xf32, #tpu.memory_space<vmem>>, vector<1x116xf32>
    %43 = vector.broadcast %42 : vector<1x116xf32> to vector<2x116xf32>
    %44 = arith.addf %41, %43 : vector<2x116xf32>
    %45 = vector.extract_strided_slice %44 {offsets = [0, 0], sizes = [2, 112], strides = [1, 1]} : vector<2x116xf32> to vector<2x112xf32>
    %46 = vector.extract_strided_slice %44 {offsets = [0, 112], sizes = [2, 4], strides = [1, 1]} : vector<2x116xf32> to vector<2x4xf32>
    %47 = arith.truncf %45 : vector<2x112xf32> to vector<2x112xbf16>
    %c0_26 = arith.constant 0 : index
    %c0_27 = arith.constant 0 : index
    %48 = vector.load %arg8[%c0_26, %c0_27] : memref<112x4xbf16, #tpu.memory_space<vmem>>, vector<112x4xbf16>
    %cst_28 = arith.constant dense<0.000000e+00> : vector<2x4xf32>
    %49 = tpu.matmul %47, %48, %cst_28 {dimension_numbers = #tpu.dot_dimension_numbers<[1], [0], [0], [1], [0, 0, 1, 1], [], []>} : vector<2x112xbf16>, vector<112x4xbf16>, vector<2x4xf32> -> vector<2x4xf32>
    %c0_29 = arith.constant 0 : index
    %c0_30 = arith.constant 0 : index
    %50 = vector.load %arg9[%c0_29, %c0_30] : memref<1x4xf32, #tpu.memory_space<vmem>>, vector<1x4xf32>
    %51 = vector.broadcast %50 : vector<1x4xf32> to vector<2x4xf32>
    %52 = arith.addf %49, %51 : vector<2x4xf32>
    %53 = tpu.transpose %33, [0, 2, 1] : vector<2x16x8xf32> -> vector<2x8x16xf32>
    %54 = vector.shape_cast %53 : vector<2x8x16xf32> to vector<2x128xf32>
    %c0_31 = arith.constant 0 : index
    %c0_32 = arith.constant 0 : index
    %55 = vector.load %arg10[%c0_31, %c0_32] : memref<2x384xf32, #tpu.memory_space<vmem>>, vector<2x128xf32>
    tpu.vector_store %arg10[%c0_31, %c0_32], %54 {strides = array<i32>} : memref<2x384xf32, #tpu.memory_space<vmem>>, vector<2x128xf32>,
    %c0_33 = arith.constant 0 : index
    %c128 = arith.constant 128 : index
    %56 = vector.load %arg10[%c0_33, %c128] : memref<2x384xf32, #tpu.memory_space<vmem>>, vector<2x112xf32>
    tpu.vector_store %arg10[%c0_33, %c128], %45 {strides = array<i32>} : memref<2x384xf32, #tpu.memory_space<vmem>>, vector<2x112xf32>,
    %c0_34 = arith.constant 0 : index
    %c240 = arith.constant 240 : index
    %57 = vector.load %arg10[%c0_34, %c240] : memref<2x384xf32, #tpu.memory_space<vmem>>, vector<2x8xf32>
    tpu.vector_store %arg10[%c0_34, %c240], %38 {strides = array<i32>} : memref<2x384xf32, #tpu.memory_space<vmem>>, vector<2x8xf32>,
    %c0_35 = arith.constant 0 : index
    %c248 = arith.constant 248 : index
    %58 = vector.load %arg10[%c0_35, %c248] : memref<2x384xf32, #tpu.memory_space<vmem>>, vector<2x8xf32>
    tpu.vector_store %arg10[%c0_35, %c248], %34 {strides = array<i32>} : memref<2x384xf32, #tpu.memory_space<vmem>>, vector<2x8xf32>,
    %cst_36 = arith.constant 0.000000e+00 : f32
    %59 = vector.broadcast %cst_36 : f32 to vector<2x128xf32>
    %c0_37 = arith.constant 0 : index
    %c256 = arith.constant 256 : index
    %60 = vector.load %arg10[%c0_37, %c256] : memref<2x384xf32, #tpu.memory_space<vmem>>, vector<2x128xf32>
    tpu.vector_store %arg10[%c0_37, %c256], %59 {strides = array<i32>} : memref<2x384xf32, #tpu.memory_space<vmem>>, vector<2x128xf32>,
    %c0_38 = arith.constant 0 : index
    %c256_39 = arith.constant 256 : index
    %61 = vector.load %arg10[%c0_38, %c256_39] : memref<2x384xf32, #tpu.memory_space<vmem>>, vector<2x4xf32>
    tpu.vector_store %arg10[%c0_38, %c256_39], %46 {strides = array<i32>} : memref<2x384xf32, #tpu.memory_space<vmem>>, vector<2x4xf32>,
    %c0_40 = arith.constant 0 : index
    %c260 = arith.constant 260 : index
    %62 = vector.load %arg10[%c0_40, %c260] : memref<2x384xf32, #tpu.memory_space<vmem>>, vector<2x4xf32>
    tpu.vector_store %arg10[%c0_40, %c260], %52 {strides = array<i32>} : memref<2x384xf32, #tpu.memory_space<vmem>>, vector<2x4xf32>,
    return
  }
}

</mosaic_0001>

<llo_original>
// kernel: newnet_forward.1
$region0: #{newnet_forward.1}
  #allocation0 [shape = 'u32[]', space=smem, size = 0x4, offset = 0x4, fixed_abs, tag = 'smem constant byte address 0x4 - core index']
  #allocation1 [shape = 'u32[72,128]{1,0:T(1,128)}', space=vmem, size = 0x9000, scoped, tag = 'internal scratch']
  %s0 = inlined_call_operand.vmem [shape: f32[2,64,16], index: 0, kind: input, shape index: {}]
  %s1 = inlined_call_operand.vmem [shape: bf16[64,32], index: 1, kind: input, shape index: {}]
  %s2 = inlined_call_operand.vmem [shape: f32[1,32], index: 2, kind: input, shape index: {}]
  %s3 = inlined_call_operand.vmem [shape: bf16[32,32], index: 3, kind: input, shape index: {}]
  %s4 = inlined_call_operand.vmem [shape: f32[1,32], index: 4, kind: input, shape index: {}]
  %s5 = inlined_call_operand.vmem [shape: bf16[32,8], index: 5, kind: input, shape index: {}]
  %s6 = inlined_call_operand.vmem [shape: bf16[8,116], index: 6, kind: input, shape index: {}]
  %s7 = inlined_call_operand.vmem [shape: f32[1,116], index: 7, kind: input, shape index: {}]
  %s8 = inlined_call_operand.vmem [shape: bf16[112,4], index: 8, kind: input, shape index: {}]
  %s9 = inlined_call_operand.vmem [shape: f32[1,4], index: 9, kind: input, shape index: {}]
  %s10 = inlined_call_operand.vmem [shape: f32[2,384], index: 10, kind: output, shape index: {}]
  %s11 = sld [smem:[#allocation0]]
  $region50: #{newnet_forward.1} parent=0
    _
  %s13 = ssub.s32 1, %s11
  %s14 = scalar_select 0, %s13, %s11
  // Predicated region
  $region2: #{newnet_forward.1} parent=0 // pred_check
    _
  $region3: #{newnet_forward.1} parent=0 // pred_check_branch
    %16 = sbr.rel (0) target = $region5
  $region4: #{newnet_forward.1} parent=0 // pred_region
    _
  $region5: #{newnet_forward.1} parent=0 // pred_fallthru
    _
  // Predicated region
  $region6: #{newnet_forward.1} parent=0 // pred_check
    _
  $region7: #{newnet_forward.1} parent=0 // pred_check_branch
    %18 = sbr.rel (0) target = $region9
  $region8: #{newnet_forward.1} parent=0 // pred_region
    _
  $region9: #{newnet_forward.1} parent=0 // pred_fallthru
    _
  // Predicated region
  $region10: #{newnet_forward.1} parent=0 // pred_check
    _
  $region11: #{newnet_forward.1} parent=0 // pred_check_branch
    %20 = sbr.rel (0) target = $region13
  $region12: #{newnet_forward.1} parent=0 // pred_region
    _
  $region13: #{newnet_forward.1} parent=0 // pred_fallthru
    _
  // Predicated region
  $region14: #{newnet_forward.1} parent=0 // pred_check
    _
  $region15: #{newnet_forward.1} parent=0 // pred_check_branch
    %22 = sbr.rel (0) target = $region17
  $region16: #{newnet_forward.1} parent=0 // pred_region
    _
  $region17: #{newnet_forward.1} parent=0 // pred_fallthru
    _
  // Predicated region
  $region18: #{newnet_forward.1} parent=0 // pred_check
    _
  $region19: #{newnet_forward.1} parent=0 // pred_check_branch
    %24 = sbr.rel (0) target = $region21
  $region20: #{newnet_forward.1} parent=0 // pred_region
    _
  $region21: #{newnet_forward.1} parent=0 // pred_fallthru
    _
  // Predicated region
  $region22: #{newnet_forward.1} parent=0 // pred_check
    _
  $region23: #{newnet_forward.1} parent=0 // pred_check_branch
    %26 = sbr.rel (0) target = $region25
  $region24: #{newnet_forward.1} parent=0 // pred_region
    _
  $region25: #{newnet_forward.1} parent=0 // pred_fallthru
    _
  // Predicated region
  $region26: #{newnet_forward.1} parent=0 // pred_check
    _
  $region27: #{newnet_forward.1} parent=0 // pred_check_branch
    %28 = sbr.rel (0) target = $region29
  $region28: #{newnet_forward.1} parent=0 // pred_region
    _
  $region29: #{newnet_forward.1} parent=0 // pred_fallthru
    _
  // Predicated region
  $region30: #{newnet_forward.1} parent=0 // pred_check
    _
  $region31: #{newnet_forward.1} parent=0 // pred_check_branch
    %30 = sbr.rel (0) target = $region33
  $region32: #{newnet_forward.1} parent=0 // pred_region
    _
  $region33: #{newnet_forward.1} parent=0 // pred_fallthru
    _
  // Predicated region
  $region34: #{newnet_forward.1} parent=0 // pred_check
    _
  $region35: #{newnet_forward.1} parent=0 // pred_check_branch
    %32 = sbr.rel (0) target = $region37
  $region36: #{newnet_forward.1} parent=0 // pred_region
    _
  $region37: #{newnet_forward.1} parent=0 // pred_fallthru
    _
  // Predicated region
  $region38: #{newnet_forward.1} parent=0 // pred_check
    _
  $region39: #{newnet_forward.1} parent=0 // pred_check_branch
    %34 = sbr.rel (0) target = $region41
  $region40: #{newnet_forward.1} parent=0 // pred_region
    _
  $region41: #{newnet_forward.1} parent=0 // pred_fallthru
    _
  %v36 = vld [vmem:[%s0] sm:$0xff]
  %v37 = vld [vmem:[%s0 + $0x8] sm:$0xff]
  %v38 = vld [vmem:[%s0 + $0x10] sm:$0xff]
  %v39 = vld [vmem:[%s0 + $0x18] sm:$0xff]
  %v40 = vld [vmem:[%s0 + $0x20] sm:$0xff]
  %v41 = vld [vmem:[%s0 + $0x28] sm:$0xff]
  %v42 = vld [vmem:[%s0 + $0x30] sm:$0xff]
  %v43 = vld [vmem:[%s0 + $0x38] sm:$0xff]
  %v44 = vld [vmem:[%s0 + $0x40] sm:$0xff]
  %v45 = vld [vmem:[%s0 + $0x48] sm:$0xff]
  %v46 = vld [vmem:[%s0 + $0x50] sm:$0xff]
  %v47 = vld [vmem:[%s0 + $0x58] sm:$0xff]
  %v48 = vld [vmem:[%s0 + $0x60] sm:$0xff]
  %v49 = vld [vmem:[%s0 + $0x68] sm:$0xff]
  %v50 = vld [vmem:[%s0 + $0x70] sm:$0xff]
  %v51 = vld [vmem:[%s0 + $0x78] sm:$0xff]
  %52 = vxpose.xlu0.b32.start [1/16] %v36, 128
  %53 = vxpose.xlu0.b32.cont [2/16] %v37, 128
  %54 = vxpose.xlu0.b32.cont [3/16] %v38, 128
  %55 = vxpose.xlu0.b32.cont [4/16] %v39, 128
  %56 = vxpose.xlu0.b32.cont [5/16] %v40, 128
  %57 = vxpose.xlu0.b32.cont [6/16] %v41, 128
  %58 = vxpose.xlu0.b32.cont [7/16] %v42, 128
  %59 = vxpose.xlu0.b32.cont [8/16] %v43, 128
  %60 = vxpose.xlu0.b32.cont [9/16] 0.0, 128
  %61 = vxpose.xlu0.b32.cont [10/16] 0.0, 128
  %62 = vxpose.xlu0.b32.cont [11/16] 0.0, 128
  %63 = vxpose.xlu0.b32.cont [12/16] 0.0, 128
  %64 = vxpose.xlu0.b32.cont [13/16] 0.0, 128
  %65 = vxpose.xlu0.b32.cont [14/16] 0.0, 128
  %66 = vxpose.xlu0.b32.cont [15/16] 0.0, 128
  %67 = vxpose.xlu0.b32.end [16/16] 0.0, 128
  %v68 = vpop.trf.xlu0
  %v69 = vpop.trf.xlu0
  %v70 = vpop.trf.xlu0
  %v71 = vpop.trf.xlu0
  %v72 = vpop.trf.xlu0
  %v73 = vpop.trf.xlu0
  %v74 = vpop.trf.xlu0
  %v75 = vpop.trf.xlu0
  %v76 = vpop.trf.xlu0
  %v77 = vpop.trf.xlu0
  %v78 = vpop.trf.xlu0
  %v79 = vpop.trf.xlu0
  %v80 = vpop.trf.xlu0
  %v81 = vpop.trf.xlu0
  %v82 = vpop.trf.xlu0
  %v83 = vpop.trf.xlu0
  %84 = vxpose.xlu0.b32.start [1/16] %v44, 128
  %85 = vxpose.xlu0.b32.cont [2/16] %v45, 128
  %86 = vxpose.xlu0.b32.cont [3/16] %v46, 128
  %87 = vxpose.xlu0.b32.cont [4/16] %v47, 128
  %88 = vxpose.xlu0.b32.cont [5/16] %v48, 128
  %89 = vxpose.xlu0.b32.cont [6/16] %v49, 128
  %90 = vxpose.xlu0.b32.cont [7/16] %v50, 128
  %91 = vxpose.xlu0.b32.cont [8/16] %v51, 128
  %92 = vxpose.xlu0.b32.cont [9/16] 0.0, 128
  %93 = vxpose.xlu0.b32.cont [10/16] 0.0, 128
  %94 = vxpose.xlu0.b32.cont [11/16] 0.0, 128
  %95 = vxpose.xlu0.b32.cont [12/16] 0.0, 128
  %96 = vxpose.xlu0.b32.cont [13/16] 0.0, 128
  %97 = vxpose.xlu0.b32.cont [14/16] 0.0, 128
  %98 = vxpose.xlu0.b32.cont [15/16] 0.0, 128
  %99 = vxpose.xlu0.b32.end [16/16] 0.0, 128
  %v100 = vpop.trf.xlu0
  %v101 = vpop.trf.xlu0
  %v102 = vpop.trf.xlu0
  %v103 = vpop.trf.xlu0
  %v104 = vpop.trf.xlu0
  %v105 = vpop.trf.xlu0
  %v106 = vpop.trf.xlu0
  %v107 = vpop.trf.xlu0
  %v108 = vpop.trf.xlu0
  %v109 = vpop.trf.xlu0
  %v110 = vpop.trf.xlu0
  %v111 = vpop.trf.xlu0
  %v112 = vpop.trf.xlu0
  %v113 = vpop.trf.xlu0
  %v114 = vpop.trf.xlu0
  %v115 = vpop.trf.xlu0
  %v116 = vpack.c.bf16 %v69, %v68
  %v117 = vpack.c.bf16 %v101, %v100
  %v118 = vld [vmem:[%s1] sm:$0xf]
  %v119 = vld [vmem:[%s1 + $0x4] sm:$0xf]
  %v120 = vld [vmem:[%s1 + $0x8] sm:$0xf]
  %v121 = vld [vmem:[%s1 + $0xc] sm:$0xf]
  %v122 = vld [vmem:[%s1 + $0x10] sm:$0xf]
  %v123 = vld [vmem:[%s1 + $0x14] sm:$0xf]
  %v124 = vld [vmem:[%s1 + $0x18] sm:$0xf]
  %v125 = vld [vmem:[%s1 + $0x1c] sm:$0xf]
  %v126 = vld [vmem:[%s2] sm:$0x1]
  %v128 = vperm.slane %v126, 0
  %v138 = vunpack.c.l.b16 %v118
  %v139 = vunpack.c.l.b16 %v119
  %v140 = vunpack.c.l.b16 %v120
  %v141 = vunpack.c.l.b16 %v121
  %v142 = vunpack.c.l.b16 %v122
  %v143 = vunpack.c.l.b16 %v123
  %v144 = vunpack.c.l.b16 %v124
  %v145 = vunpack.c.l.b16 %v125
  %v146 = vpack.c.b16 %v139, %v138
  %v147 = vpack.c.b16 %v141, %v140
  %v148 = vpack.c.b16 %v143, %v142
  %v149 = vpack.c.b16 %v145, %v144
  %vm154 = vcmask 523264
  %v156 = vsel %vm154, %v116, 0
  %v159 = vsel %vm154, %v117, 0
  %161 = vmatpush.bf16.msra.mxu0 0
  %162 = vmatpush.bf16.msra.mxu0 0
  %163 = vmatpush.bf16.msra.mxu0 0
  %164 = vmatpush.bf16.msra.mxu0 0
  %165 = vmatpush.bf16.msra.mxu0 %v149
  %166 = vmatpush.bf16.msra.mxu0 %v148
  %167 = vmatpush.bf16.msra.mxu0 %v147
  %168 = vmatpush.bf16.msra.mxu0 %v146
  %169 = vmatmul.bf16.gmra.mxu0 %v156
  %v170 = vpop.f32.mrf.mxu0
  %v171 = vadd.f32 %v128, %v170
  %v172 = vpop.f32.mrf.mxu0
  %v173 = vadd.f32 %v128, %v172
  %174 = vmatmul.bf16.gmra.mxu0 %v159
  %v175 = vpop.f32.mrf.mxu0
  %v176 = vadd.f32 %v128, %v175
  %v177 = vpop.f32.mrf.mxu0
  %v178 = vadd.f32 %v128, %v177
  %179 = vdwg.mxu0
  %v180 = vmax.f32 %v171, 0.0
  %v181 = vmax.f32 %v173, 0.0
  %v182 = vmax.f32 %v176, 0.0
  %v183 = vmax.f32 %v178, 0.0
  %v184 = vpack.c.bf16 %v181, %v180
  %v185 = vpack.c.bf16 %v183, %v182
  %v186 = vld [vmem:[%s3] sm:$0xf]
  %v187 = vld [vmem:[%s3 + $0x4] sm:$0xf]
  %v188 = vld [vmem:[%s3 + $0x8] sm:$0xf]
  %v189 = vld [vmem:[%s3 + $0xc] sm:$0xf]
  %v190 = vld [vmem:[%s4] sm:$0x1]
  %v192 = vperm.slane %v190, 0
  %v198 = vunpack.c.l.b16 %v186
  %v199 = vunpack.c.l.b16 %v187
  %v200 = vunpack.c.l.b16 %v188
  %v201 = vunpack.c.l.b16 %v189
  %v202 = vpack.c.b16 %v199, %v198
  %v203 = vpack.c.b16 %v201, %v200
  %vm206 = vcmask 261120
  %v208 = vsel %vm206, %v184, 0
  %v211 = vsel %vm206, %v185, 0
  %213 = vmatpush.bf16.msra.mxu0 0
  %214 = vmatpush.bf16.msra.mxu0 0
  %215 = vmatpush.bf16.msra.mxu0 0
  %216 = vmatpush.bf16.msra.mxu0 0
  %217 = vmatpush.bf16.msra.mxu0 0
  %218 = vmatpush.bf16.msra.mxu0 0
  %219 = vmatpush.bf16.msra.mxu0 %v203
  %220 = vmatpush.bf16.msra.mxu0 %v202
  %221 = vmatmul.bf16.gmra.mxu0 %v208
  %v222 = vpop.f32.mrf.mxu0
  %v223 = vadd.f32 %v192, %v222
  %v224 = vpop.f32.mrf.mxu0
  %v225 = vadd.f32 %v192, %v224
  %226 = vmatmul.bf16.gmra.mxu0 %v211
  %v227 = vpop.f32.mrf.mxu0
  %v228 = vadd.f32 %v192, %v227
  %v229 = vpop.f32.mrf.mxu0
  %v230 = vadd.f32 %v192, %v229
  %231 = vdwg.mxu0
  %v232 = vxor.u32 %v223, 2147483648
  %v233 = vxor.u32 %v225, 2147483648
  %v234 = vxor.u32 %v228, 2147483648
  %v235 = vxor.u32 %v230, 2147483648
  %v236 = vmul.f32 %v232, 1.442695
  %v237 = vpow.pop %v236
  %v238 = vmul.f32 %v233, 1.442695
  %v239 = vpow.pop %v238
  %v240 = vmul.f32 %v234, 1.442695
  %v241 = vpow.pop %v240
  %v242 = vmul.f32 %v235, 1.442695
  %v243 = vpow.pop %v242
  %v244 = vadd.f32 %v237, 1.0
  %v245 = vadd.f32 %v239, 1.0
  %v246 = vadd.f32 %v241, 1.0
  %v247 = vadd.f32 %v243, 1.0
  %v248 = vrcp.pop %v244
  %v249 = vmul.f32 %v244, %v248
  %v250 = vsub.f32 1.0, %v249
  %v251 = vmul.f32 %v248, %v250
  %v252 = vadd.f32 %v248, %v251
  %vm253 = vweird.f32 %v244
  %vm254 = vweird.f32 %v248
  %vm255 = vmor %vm253, %vm254
  %v256 = vsel %vm255, %v248, %v252
  %v257 = vand.u32 2147483647, %v244
  %vm258 = vcmp.eq.f32.partialorder %v257, 8.507059e+37
  %v259 = vand.u32 %v244, 2147483648
  %v260 = vor.u32 1.1754944e-38, %v259
  %v261 = vsel %vm258, %v260, %v256
  %v262 = vmul.f32 1.0, %v261
  %v263 = vrcp.pop %v245
  %v264 = vmul.f32 %v245, %v263
  %v265 = vsub.f32 1.0, %v264
  %v266 = vmul.f32 %v263, %v265
  %v267 = vadd.f32 %v263, %v266
  %vm268 = vweird.f32 %v245
  %vm269 = vweird.f32 %v263
  %vm270 = vmor %vm268, %vm269
  %v271 = vsel %vm270, %v263, %v267
  %v272 = vand.u32 2147483647, %v245
  %vm273 = vcmp.eq.f32.partialorder %v272, 8.507059e+37
  %v274 = vand.u32 %v245, 2147483648
  %v275 = vor.u32 1.1754944e-38, %v274
  %v276 = vsel %vm273, %v275, %v271
  %v277 = vmul.f32 1.0, %v276
  %v278 = vrcp.pop %v246
  %v279 = vmul.f32 %v246, %v278
  %v280 = vsub.f32 1.0, %v279
  %v281 = vmul.f32 %v278, %v280
  %v282 = vadd.f32 %v278, %v281
  %vm283 = vweird.f32 %v246
  %vm284 = vweird.f32 %v278
  %vm285 = vmor %vm283, %vm284
  %v286 = vsel %vm285, %v278, %v282
  %v287 = vand.u32 2147483647, %v246
  %vm288 = vcmp.eq.f32.partialorder %v287, 8.507059e+37
  %v289 = vand.u32 %v246, 2147483648
  %v290 = vor.u32 1.1754944e-38, %v289
  %v291 = vsel %vm288, %v290, %v286
  %v292 = vmul.f32 1.0, %v291
  %v293 = vrcp.pop %v247
  %v294 = vmul.f32 %v247, %v293
  %v295 = vsub.f32 1.0, %v294
  %v296 = vmul.f32 %v293, %v295
  %v297 = vadd.f32 %v293, %v296
  %vm298 = vweird.f32 %v247
  %vm299 = vweird.f32 %v293
  %vm300 = vmor %vm298, %vm299
  %v301 = vsel %vm300, %v293, %v297
  %v302 = vand.u32 2147483647, %v247
  %vm303 = vcmp.eq.f32.partialorder %v302, 8.507059e+37
  %v304 = vand.u32 %v247, 2147483648
  %v305 = vor.u32 1.1754944e-38, %v304
  %v306 = vsel %vm303, %v305, %v301
  %v307 = vmul.f32 1.0, %v306
  %v308 = vpack.c.bf16 %v277, %v262
  %v309 = vpack.c.bf16 %v307, %v292
  %v310 = vld [vmem:[%s5] sm:$0xf]
  %v311 = vld [vmem:[%s5 + $0x4] sm:$0xf]
  %v312 = vld [vmem:[%s5 + $0x8] sm:$0xf]
  %v313 = vld [vmem:[%s5 + $0xc] sm:$0xf]
  %v318 = vunpack.c.l.b16 %v310
  %v319 = vunpack.c.l.b16 %v311
  %v320 = vunpack.c.l.b16 %v312
  %v321 = vunpack.c.l.b16 %v313
  %v322 = vpack.c.b16 %v319, %v318
  %v323 = vpack.c.b16 %v321, %v320
  %v327 = vsel %vm206, %v308, 0
  %v330 = vsel %vm206, %v309, 0
  %332 = vmatpush.bf16.msra.mxu0 0
  %333 = vmatpush.bf16.msra.mxu0 0
  %334 = vmatpush.bf16.msra.mxu0 0
  %335 = vmatpush.bf16.msra.mxu0 0
  %336 = vmatpush.bf16.msra.mxu0 0
  %337 = vmatpush.bf16.msra.mxu0 0
  %338 = vmatpush.bf16.msra.mxu0 %v323
  %339 = vmatpush.bf16.msra.mxu0 %v322
  %340 = vmatmul.bf16.gmra.mxu0 %v327
  %v341 = vpop.f32.mrf.mxu0
  %v342 = vadd.f32 0.0, %v341
  %v343 = vpop.f32.mrf.mxu0
  %v344 = vadd.f32 0.0, %v343
  %345 = vmatmul.bf16.gmra.mxu0 %v330
  %v346 = vpop.f32.mrf.mxu0
  %v347 = vadd.f32 0.0, %v346
  %v348 = vpop.f32.mrf.mxu0
  %v349 = vadd.f32 0.0, %v348
  %350 = vdwg.mxu0
  %v351 = vmul.f32 %v262, %v262
  %v352 = vmul.f32 %v277, %v277
  %v353 = vmul.f32 %v292, %v292
  %v354 = vmul.f32 %v307, %v307
  %v355 = vsel %vm206, %v351, 0.0
  %356 = vadd.xlane.f32.xlu0 %v355
  %v357 = vpop.xlane.xlu0 %356
  %v358 = vsel %vm206, %v352, 0.0
  %359 = vadd.xlane.f32.xlu0 %v358
  %v360 = vpop.xlane.xlu0 %359
  %v361 = vsel %vm206, %v353, 0.0
  %362 = vadd.xlane.f32.xlu0 %v361
  %v363 = vpop.xlane.xlu0 %362
  %v364 = vsel %vm206, %v354, 0.0
  %365 = vadd.xlane.f32.xlu0 %v364
  %v366 = vpop.xlane.xlu0 %365
  %v367 = vmax.f32 %v357, 1e-24
  %v368 = vmax.f32 %v360, 1e-24
  %v369 = vmax.f32 %v363, 1e-24
  %v370 = vmax.f32 %v366, 1e-24
  %v371 = vrsqrt.pop %v367
  %v372 = vmul.f32 %v371, %v367
  %v373 = vmul.f32 %v372, %v371
  %v374 = vmul.f32 0.5, %v373
  %v375 = vsub.f32 1.5, %v374
  %v376 = vmul.f32 %v371, %v375
  %vm377 = vweird.f32 %v367
  %vm378 = vweird.f32 %v371
  %vm379 = vmor %vm377, %vm378
  %v380 = vsel %vm379, %v371, %v376
  %v381 = vrsqrt.pop %v368
  %v382 = vmul.f32 %v381, %v368
  %v383 = vmul.f32 %v382, %v381
  %v384 = vmul.f32 0.5, %v383
  %v385 = vsub.f32 1.5, %v384
  %v386 = vmul.f32 %v381, %v385
  %vm387 = vweird.f32 %v368
  %vm388 = vweird.f32 %v381
  %vm389 = vmor %vm387, %vm388
  %v390 = vsel %vm389, %v381, %v386
  %v391 = vrsqrt.pop %v369
  %v392 = vmul.f32 %v391, %v369
  %v393 = vmul.f32 %v392, %v391
  %v394 = vmul.f32 0.5, %v393
  %v395 = vsub.f32 1.5, %v394
  %v396 = vmul.f32 %v391, %v395
  %vm397 = vweird.f32 %v369
  %vm398 = vweird.f32 %v391
  %vm399 = vmor %vm397, %vm398
  %v400 = vsel %vm399, %v391, %v396
  %v401 = vrsqrt.pop %v370
  %v402 = vmul.f32 %v401, %v370
  %v403 = vmul.f32 %v402, %v401
  %v404 = vmul.f32 0.5, %v403
  %v405 = vsub.f32 1.5, %v404
  %v406 = vmul.f32 %v401, %v405
  %vm407 = vweird.f32 %v370
  %vm408 = vweird.f32 %v401
  %vm409 = vmor %vm407, %vm408
  %v410 = vsel %vm409, %v401, %v406
  %v411 = vmul.f32 %v342, %v380
  %v412 = vmul.f32 %v344, %v390
  %v413 = vmul.f32 %v347, %v400
  %v414 = vmul.f32 %v349, %v410
  %vm415 = vcmask 64512
  %v416 = vsel %vm415, %v342, -inf
  %v417 = vsel %vm415, %v344, -inf
  %v418 = vmax.f32 %v416, %v417
  %v419 = vrot.slane %v418, 4
  %v420 = vmax.f32 %v418, %v419
  %v421 = vrot.slane %v420, 2
  %v422 = vmax.f32 %v420, %v421
  %v423 = vrot.slane %v422, 1
  %v424 = vmax.f32 %v422, %v423
  %v425 = vsel %vm415, %v347, -inf
  %v426 = vsel %vm415, %v349, -inf
  %v427 = vmax.f32 %v425, %v426
  %v428 = vrot.slane %v427, 4
  %v429 = vmax.f32 %v427, %v428
  %v430 = vrot.slane %v429, 2
  %v431 = vmax.f32 %v429, %v430
  %v432 = vrot.slane %v431, 1
  %v433 = vmax.f32 %v431, %v432
  %v434 = vsel %vm415, %v411, -inf
  %v435 = vsel %vm415, %v412, -inf
  %v436 = vmax.f32 %v434, %v435
  %v437 = vrot.slane %v436, 4
  %v438 = vmax.f32 %v436, %v437
  %v439 = vrot.slane %v438, 2
  %v440 = vmax.f32 %v438, %v439
  %v441 = vrot.slane %v440, 1
  %v442 = vmax.f32 %v440, %v441
  %v443 = vsel %vm415, %v413, -inf
  %v444 = vsel %vm415, %v414, -inf
  %v445 = vmax.f32 %v443, %v444
  %v446 = vrot.slane %v445, 4
  %v447 = vmax.f32 %v445, %v446
  %v448 = vrot.slane %v447, 2
  %v449 = vmax.f32 %v447, %v448
  %v450 = vrot.slane %v449, 1
  %v451 = vmax.f32 %v449, %v450
  %v452 = vsub.f32 0.0, %v442
  %v453 = vsub.f32 0.0, %v451
  %v454 = vpack.c.bf16 %v424, %v424
  %v455 = vpack.c.bf16 %v433, %v433
  %v456 = vld [vmem:[%s6] sm:$0xf]
  %v457 = vld [vmem:[%s7] sm:$0x1]
  %v459 = vperm.slane %v457, 0
  %v463 = vunpack.c.l.b16 %v454
  %v464 = vunpack.c.l.b16 %v455
  %vm465 = vcmask 1041409
  %v466 = vsel %vm465, %v464, %v463
  %v467 = vpack.c.b16 %v466, %v466
  %v469 = vsel %vm415, %v467, 0
  %vm471 = vcmask 1043456
  %v473 = vsel %vm471, %v456, 0
  %475 = vmatpush.bf16.msra.mxu0 0
  %476 = vmatpush.bf16.msra.mxu0 0
  %477 = vmatpush.bf16.msra.mxu0 0
  %478 = vmatpush.bf16.msra.mxu0 0
  %479 = vmatpush.bf16.msra.mxu0 0
  %480 = vmatpush.bf16.msra.mxu0 0
  %481 = vmatpush.bf16.msra.mxu0 0
  %482 = vmatpush.bf16.msra.mxu0 %v473
  %483 = vmatmul.bf16.gmra.mxu0 %v469
  %v484 = vpop.f32.mrf.mxu0
  %v485 = vadd.f32 %v459, %v484
  %v486 = vpop.f32.mrf.mxu0
  %487 = vdwg.mxu0
  %v488 = vpack.c.bf16 %v485, %v485
  %v489 = vld [vmem:[%s8] sm:$0xf]
  %v490 = vld [vmem:[%s8 + $0x4] sm:$0xf]
  %v491 = vld [vmem:[%s8 + $0x8] sm:$0xf]
  %v492 = vld [vmem:[%s8 + $0xc] sm:$0xf]
  %v493 = vld [vmem:[%s8 + $0x10] sm:$0xf]
  %v494 = vld [vmem:[%s8 + $0x14] sm:$0xf]
  %v495 = vld [vmem:[%s8 + $0x18] sm:$0xf]
  %v496 = vld [vmem:[%s8 + $0x1c] sm:$0xf]
  %v497 = vld [vmem:[%s8 + $0x20] sm:$0xf]
  %v498 = vld [vmem:[%s8 + $0x24] sm:$0xf]
  %v499 = vld [vmem:[%s8 + $0x28] sm:$0xf]
  %v500 = vld [vmem:[%s8 + $0x2c] sm:$0xf]
  %v501 = vld [vmem:[%s8 + $0x30] sm:$0xf]
  %v502 = vld [vmem:[%s8 + $0x34] sm:$0xf]
  %v503 = vld [vmem:[%s9] sm:$0x1]
  %v505 = vperm.slane %v503, 0
  %v521 = vunpack.c.l.b16 %v489
  %v522 = vunpack.c.l.b16 %v490
  %v523 = vunpack.c.l.b16 %v491
  %v524 = vunpack.c.l.b16 %v492
  %v525 = vunpack.c.l.b16 %v493
  %v526 = vunpack.c.l.b16 %v494
  %v527 = vunpack.c.l.b16 %v495
  %v528 = vunpack.c.l.b16 %v496
  %v529 = vunpack.c.l.b16 %v497
  %v530 = vunpack.c.l.b16 %v498
  %v531 = vunpack.c.l.b16 %v499
  %v532 = vunpack.c.l.b16 %v500
  %v533 = vunpack.c.l.b16 %v501
  %v534 = vunpack.c.l.b16 %v502
  %v535 = vpack.c.b16 %v522, %v521
  %v536 = vpack.c.b16 %v524, %v523
  %v537 = vpack.c.b16 %v526, %v525
  %v538 = vpack.c.b16 %v528, %v527
  %v539 = vpack.c.b16 %v530, %v529
  %v540 = vpack.c.b16 %v532, %v531
  %v541 = vpack.c.b16 %v534, %v533
  %vm549 = vcmask 916480
  %v551 = vsel %vm549, %v488, 0
  %553 = vmatpush.bf16.msra.mxu0 0
  %554 = vmatpush.bf16.msra.mxu0 %v541
  %555 = vmatpush.bf16.msra.mxu0 %v540
  %556 = vmatpush.bf16.msra.mxu0 %v539
  %557 = vmatpush.bf16.msra.mxu0 %v538
  %558 = vmatpush.bf16.msra.mxu0 %v537
  %559 = vmatpush.bf16.msra.mxu0 %v536
  %560 = vmatpush.bf16.msra.mxu0 %v535
  %561 = vmatmul.bf16.gmra.mxu0 %v551
  %v562 = vpop.f32.mrf.mxu0
  %v563 = vadd.f32 %v505, %v562
  %v564 = vpop.f32.mrf.mxu0
  %565 = vdwg.mxu0
  %566 = vxpose.xlu0.b32.start [1/16] %v342, 128
  %567 = vxpose.xlu0.b32.cont [2/16] %v344, 128
  %568 = vxpose.xlu0.b32.cont [3/16] 0.0, 128
  %569 = vxpose.xlu0.b32.cont [4/16] 0.0, 128
  %570 = vxpose.xlu0.b32.cont [5/16] 0.0, 128
  %571 = vxpose.xlu0.b32.cont [6/16] 0.0, 128
  %572 = vxpose.xlu0.b32.cont [7/16] 0.0, 128
  %573 = vxpose.xlu0.b32.cont [8/16] 0.0, 128
  %574 = vxpose.xlu0.b32.cont [9/16] 0.0, 128
  %575 = vxpose.xlu0.b32.cont [10/16] 0.0, 128
  %576 = vxpose.xlu0.b32.cont [11/16] 0.0, 128
  %577 = vxpose.xlu0.b32.cont [12/16] 0.0, 128
  %578 = vxpose.xlu0.b32.cont [13/16] 0.0, 128
  %579 = vxpose.xlu0.b32.cont [14/16] 0.0, 128
  %580 = vxpose.xlu0.b32.cont [15/16] 0.0, 128
  %581 = vxpose.xlu0.b32.end [16/16] 0.0, 128
  %v582 = vpop.trf.xlu0
  %v583 = vpop.trf.xlu0
  %v584 = vpop.trf.xlu0
  %v585 = vpop.trf.xlu0
  %v586 = vpop.trf.xlu0
  %v587 = vpop.trf.xlu0
  %v588 = vpop.trf.xlu0
  %v589 = vpop.trf.xlu0
  %v590 = vpop.trf.xlu0
  %v591 = vpop.trf.xlu0
  %v592 = vpop.trf.xlu0
  %v593 = vpop.trf.xlu0
  %v594 = vpop.trf.xlu0
  %v595 = vpop.trf.xlu0
  %v596 = vpop.trf.xlu0
  %v597 = vpop.trf.xlu0
  %598 = vxpose.xlu0.b32.start [1/16] %v347, 128
  %599 = vxpose.xlu0.b32.cont [2/16] %v349, 128
  %600 = vxpose.xlu0.b32.cont [3/16] 0.0, 128
  %601 = vxpose.xlu0.b32.cont [4/16] 0.0, 128
  %602 = vxpose.xlu0.b32.cont [5/16] 0.0, 128
  %603 = vxpose.xlu0.b32.cont [6/16] 0.0, 128
  %604 = vxpose.xlu0.b32.cont [7/16] 0.0, 128
  %605 = vxpose.xlu0.b32.cont [8/16] 0.0, 128
  %606 = vxpose.xlu0.b32.cont [9/16] 0.0, 128
  %607 = vxpose.xlu0.b32.cont [10/16] 0.0, 128
  %608 = vxpose.xlu0.b32.cont [11/16] 0.0, 128
  %609 = vxpose.xlu0.b32.cont [12/16] 0.0, 128
  %610 = vxpose.xlu0.b32.cont [13/16] 0.0, 128
  %611 = vxpose.xlu0.b32.cont [14/16] 0.0, 128
  %612 = vxpose.xlu0.b32.cont [15/16] 0.0, 128
  %613 = vxpose.xlu0.b32.end [16/16] 0.0, 128
  %v614 = vpop.trf.xlu0
  %v615 = vpop.trf.xlu0
  %v616 = vpop.trf.xlu0
  %v617 = vpop.trf.xlu0
  %v618 = vpop.trf.xlu0
  %v619 = vpop.trf.xlu0
  %v620 = vpop.trf.xlu0
  %v621 = vpop.trf.xlu0
  %v622 = vpop.trf.xlu0
  %v623 = vpop.trf.xlu0
  %v624 = vpop.trf.xlu0
  %v625 = vpop.trf.xlu0
  %v626 = vpop.trf.xlu0
  %v627 = vpop.trf.xlu0
  %v628 = vpop.trf.xlu0
  %v629 = vpop.trf.xlu0
  %v630 = vrot.slane %v582, 4
  %vm631 = vcmask 1047556
  %v632 = vsel %vm631, 0.0, %v630
  %v634 = vunpack.c.l.s4 1983009808
  %v635 = vunpack.c.0.s8 %v634
  %v636 = vperm.slane %v582, %v635
  %v638 = vunpack.c.l.s4 1983009808
  %v639 = vunpack.c.0.s8 %v638
  %v640 = vperm.slane %v632, %v639
  %v641 = vrot.slane %v614, 4
  %v642 = vsel %vm631, 0.0, %v641
  %v644 = vunpack.c.l.s4 1983009808
  %v645 = vunpack.c.0.s8 %v644
  %v646 = vperm.slane %v614, %v645
  %v648 = vunpack.c.l.s4 1983009808
  %v649 = vunpack.c.0.s8 %v648
  %v650 = vperm.slane %v642, %v649
  %v651 = vrot.slane %v646, 4
  %v652 = vsel %vm631, %v651, %v636
  %v653 = vrot.slane %v636, 4
  %v654 = vsel %vm631, %v646, %v653
  %v656 = vunpack.c.l.s4 1934713408
  %v657 = vunpack.c.0.s8 %v656
  %v658 = vperm.slane %v652, %v657
  %v660 = vunpack.c.l.s4 1934713408
  %v661 = vunpack.c.0.s8 %v660
  %v662 = vperm.slane %v654, %v661
  %v663 = vrot.slane %v650, 4
  %v664 = vsel %vm631, %v663, %v640
  %v665 = vrot.slane %v640, 4
  %v666 = vsel %vm631, %v650, %v665
  %v668 = vunpack.c.l.s4 1934713408
  %v669 = vunpack.c.0.s8 %v668
  %v670 = vperm.slane %v664, %v669
  %v672 = vunpack.c.l.s4 1934713408
  %v673 = vunpack.c.0.s8 %v672
  %v674 = vperm.slane %v666, %v673
  %v675 = vrot.slane %v658, 4
  %v676 = vsel %vm631, 0.0, %v675
  %v677 = vrot.slane %v662, 4
  %v678 = vsel %vm631, 0.0, %v677
  %v679 = vrot.slane %v670, 4
  %v680 = vsel %vm631, 0.0, %v679
  %v681 = vrot.slane %v674, 4
  %v682 = vsel %vm631, 0.0, %v681
  %684 = vrot.lane.b32.xlu0 %v676, 16
  %v685 = vpop.permute.xlu0 %684
  %688 = vrot.lane.b32.xlu0 %v662, 32
  %v689 = vpop.permute.xlu0 %688
  %692 = vrot.lane.b32.xlu0 %v678, 48
  %v693 = vpop.permute.xlu0 %692
  %696 = vrot.lane.b32.xlu0 %v670, 64
  %v697 = vpop.permute.xlu0 %696
  %700 = vrot.lane.b32.xlu0 %v680, 80
  %v701 = vpop.permute.xlu0 %700
  %704 = vrot.lane.b32.xlu0 %v674, 96
  %v705 = vpop.permute.xlu0 %704
  %708 = vrot.lane.b32.xlu0 %v682, 112
  %v709 = vpop.permute.xlu0 %708
  %vm711 = vcmask 130048
  %v712 = vsel %vm711, %v658, %v685
  %v713 = vsel %vm206, %v712, %v689
  %vm714 = vcmask 392192
  %v715 = vsel %vm714, %v713, %v693
  %v716 = vsel %vm154, %v715, %v697
  %vm717 = vcmask 654336
  %v718 = vsel %vm717, %v716, %v701
  %vm719 = vcmask 785408
  %v720 = vsel %vm719, %v718, %v705
  %v721 = vsel %vm549, %v720, %v709
  %722 = vst [vmem:[%s10] sm:$0x3] %v721
  %vm723 = vcmask 910336
  %724 = vst.msk [vmem:[%s10 + $0x2] sm:$0x3] %vm723, %v485
  %vm727 = vcmask 1044484
  %v728 = vsel %vm727, %v452, %v452
  %vm729 = vcmask 1046534
  %v730 = vsel %vm729, %v452, %v728
  %v731 = vrot.slane %v453, 7
  %v732 = vsel %vm465, %v731, %v730
  %vm733 = vcmask 1043459
  %v734 = vsel %vm733, %v731, %v732
  %vm735 = vcmask 1045509
  %v736 = vsel %vm735, %v731, %v734
  %vm737 = vcmask 1047559
  %v738 = vsel %vm737, %v731, %v736
  %739 = vrot.lane.b32.xlu0 %v738, 112
  %v740 = vpop.permute.xlu0 %739
  %vm742 = vcmask 976768
  %743 = vst.msk [vmem:[%s10 + $0x2] sm:$0x3] %vm742, %v740
  %v746 = vsel %vm727, %v424, %v424
  %v747 = vsel %vm729, %v424, %v746
  %v748 = vrot.slane %v433, 7
  %v749 = vsel %vm465, %v748, %v747
  %v750 = vsel %vm733, %v748, %v749
  %v751 = vsel %vm735, %v748, %v750
  %v752 = vsel %vm737, %v748, %v751
  %753 = vrot.lane.b32.xlu0 %v752, 120
  %v754 = vpop.permute.xlu0 %753
  %vm756 = vcmask 1042368
  %757 = vst.msk [vmem:[%s10 + $0x2] sm:$0x3] %vm756, %v754
  %758 = vst [vmem:[%s10 + $0x4] sm:$0x3] 0.0
  %760 = vrot.lane.b32.xlu0 %v485, 16
  %v761 = vpop.permute.xlu0 %760
  %vm763 = vcmask 25600
  %764 = vst.msk [vmem:[%s10 + $0x4] sm:$0x3] %vm763, %v761
  %766 = vrot.lane.b32.xlu0 %v563, 4
  %v767 = vpop.permute.xlu0 %766
  %vm769 = vcmask 58400
  %770 = vst.msk [vmem:[%s10 + $0x4] sm:$0x3] %vm769, %v767
  // Predicated region
  $region42: #{newnet_forward.1} parent=0 // pred_check
    _
  $region43: #{newnet_forward.1} parent=0 // pred_check_branch
    %772 = sbr.rel (0) target = $region45
  $region44: #{newnet_forward.1} parent=0 // pred_region
    _
  $region45: #{newnet_forward.1} parent=0 // pred_fallthru
    _
  // Predicated region
  $region46: #{newnet_forward.1} parent=0 // pred_check
    _
  $region47: #{newnet_forward.1} parent=0 // pred_check_branch
    %774 = sbr.rel (0) target = $region49
  $region48: #{newnet_forward.1} parent=0 // pred_region
    _
  $region49: #{newnet_forward.1} parent=0 // pred_fallthru
    _

</llo_original>
